<compile_context>
chip_gen: v6e
topology: v6e:2x2x1
jax: 0.10.0
libtpu: 0.0.40
codegen_flags: <defaults>
</compile_context>

<pallas_src>
import numpy as np
import jax
import jax.numpy as jnp
from jax.experimental import pallas as pl
from jax.experimental.pallas import tpu as pltpu


def make_kernel(num_layers):
    """Kernel refs: coords, theta, freq_pi, (W0,b0), ..., (Wk,bk), out."""

    def kernel(*refs):
        coords_ref, theta_ref, freq_ref = refs[0], refs[1], refs[2]
        out_ref = refs[-1]
        wb_refs = refs[3:-1]

        # --- cos/sin positional encoding (channel-major) ---
        c = coords_ref[...]                        # (1, T)      f32
        fpi = freq_ref[...]                        # (pe/2, 1)   pi already folded in
        x = fpi * c                                # (pe/2, T)
        # channel order matches torch: [cos(w0..w_{k-1}), sin(w0..w_{k-1})]
        feat = jnp.concatenate([jnp.cos(x), jnp.sin(x)], axis=0)   # (pe, T)

        # --- add theta ---
        h = feat + theta_ref[...]                  # (C_in, T)

        # --- 1x1-conv MLP: dot(W, h) + bias (+ ReLU except last layer) ---
        for li in range(num_layers):
            w = wb_refs[2 * li][...]               # (Cout_l, Cin_l)
            b = wb_refs[2 * li + 1][...]           # (Cout_l, 1)
            h = jnp.dot(w, h, preferred_element_type=jnp.float32) + b
            if li < num_layers - 1:
                h = jnp.maximum(h, 0.0)

        out_ref[...] = h.astype(out_ref.dtype)     # (C_out, T), lane-dense store

    return kernel


def conv1x1_decoder_pe(coords_nchw, theta_nchw, freq, weights, biases, *, max_tile=8192):
    """coords_nchw: (B,1,H,W); theta_nchw: (B,C_in,H,W); weights[i]: (Cin_i, Cout_i);
    biases[i]: (Cout_i,); freq: (C_in//2,)."""
    B, Cc, H, W = coords_nchw.shape
    assert Cc == 1, "module shape algebra requires single-channel coords"
    C_in = theta_nchw.shape[1]
    pe_half = freq.shape[0]
    assert 2 * pe_half == C_in, "pe_dim must equal in_channels"
    C_out = weights[-1].shape[1]
    num_layers = len(weights)
    HW = H * W

    # Lane-axis tile: use the full spatial extent when it fits (always legal as
    # a full-dim block), otherwise a large multiple of 128; the ragged last
    # block (if any) is handled by Pallas' edge masking.
    if HW <= max_tile:
        tile = HW
        n_s = 1
    else:
        tile = max_tile                      # multiple of 128
        n_s = pl.cdiv(HW, tile)

    # Pure views: NCHW -> (B, C, H*W), no transposes.
    coords = coords_nchw.reshape(B, 1, HW).astype(jnp.float32)
    theta = theta_nchw.reshape(B, C_in, HW).astype(jnp.float32)
    # Fold pi into the frequencies once, as a (pe/2, 1) column.
    freq_pi = (jnp.pi * freq.astype(jnp.float32)).reshape(pe_half, 1)

    in_specs = [
        pl.BlockSpec((None, 1, tile), lambda b, s: (b, 0, s)),      # coords rows
        pl.BlockSpec((None, C_in, tile), lambda b, s: (b, 0, s)),   # theta rows
        pl.BlockSpec((pe_half, 1), lambda b, s: (0, 0)),            # pi*freq (resident)
    ]
    args = [coords, theta, freq_pi]
    for w, b in zip(weights, biases):
        wt = jnp.asarray(w, jnp.float32).T                 # (Cout_l, Cin_l)
        bt = jnp.asarray(b, jnp.float32).reshape(-1, 1)    # (Cout_l, 1)
        in_specs.append(pl.BlockSpec(wt.shape, lambda bb, s: (0, 0)))
        in_specs.append(pl.BlockSpec(bt.shape, lambda bb, s: (0, 0)))
        args.append(wt)
        args.append(bt)

    out = pl.pallas_call(
        make_kernel(num_layers),
        out_shape=jax.ShapeDtypeStruct((B, C_out, HW), jnp.float32),
        grid_spec=pltpu.PrefetchScalarGridSpec(
            num_scalar_prefetch=0,
            grid=(B, n_s),
            in_specs=in_specs,
            out_specs=pl.BlockSpec((None, C_out, tile), lambda b, s: (b, 0, s)),
        ),
        compiler_params=pltpu.CompilerParams(
            dimension_semantics=("parallel", "parallel")),
    )(*args)

    # (B, C_out, H*W) -> NCHW, pure view.
    return out.reshape(B, C_out, H, W)


def reference_forward(coords_nchw, theta_nchw, freq, weights, biases):
    """Pure-JAX replica of the torch forward (NCHW, for correctness check)."""
    x = coords_nchw[:, 0][..., None] * freq                      # (B,H,W,pe/2)
    pe = jnp.concatenate([jnp.cos(jnp.pi * x), jnp.sin(jnp.pi * x)], axis=-1)
    pe = pe.transpose(0, 3, 1, 2)                                # (B,pe,H,W)
    h = pe + theta_nchw
    for li, (w, b) in enumerate(zip(weights, biases)):
        h = jnp.einsum('bchw,cd->bdhw', h, w) + b[None, :, None, None]
        if li < len(weights) - 1:
            h = jnp.maximum(h, 0.0)
    return h


if __name__ == "__main__":
    # Module config
    in_channels = 16        # pe_dim
    hidden_channels = 32
    out_channels = 3
    depth = 3               # conv(in,hid)+relu, conv(hid,hid)+relu, conv(hid,out)
    pe_sigma = 1024.0

    # Example input shapes
    B, H, W = 2, 16, 16

    key = jax.random.PRNGKey(0)
    k_coords, k_theta, *k_ws = jax.random.split(key, 2 + 2 * depth)

    coords = jax.random.uniform(k_coords, (B, 1, H, W), dtype=jnp.float32)
    theta = jax.random.normal(k_theta, (B, in_channels, H, W), dtype=jnp.float32) * 0.1

    # posenc frequencies: exp(linspace(0, log(sigma), pe_dim // 2))
    freq = jnp.exp(jnp.linspace(0.0, np.log(pe_sigma), in_channels // 2)).astype(jnp.float32)

    # Deterministic parameter init (Conv2d 1x1 -> (C_in, C_out) matmul weights)
    layer_dims = [in_channels] + [hidden_channels] * (depth - 1) + [out_channels]
    weights, biases = [], []
    for li in range(depth):
        cin, cout = layer_dims[li], layer_dims[li + 1]
        kw, kb = jax.random.split(k_ws[li])
        bound = 1.0 / np.sqrt(cin)
        weights.append(jax.random.uniform(kw, (cin, cout), jnp.float32, -bound, bound))
        biases.append(jax.random.uniform(kb, (cout,), jnp.float32, -bound, bound))

    out = conv1x1_decoder_pe(coords, theta, freq, weights, biases)
    out = jax.block_until_ready(out)

    ref = jax.block_until_ready(reference_forward(coords, theta, freq, weights, biases))
    assert out.shape == (B, out_channels, H, W), out.shape
    np.testing.assert_allclose(np.asarray(out), np.asarray(ref), rtol=2e-2, atol=2e-2)

    print("KERNEL_OK")
</pallas_src>

<mosaic_0001>
module attributes {stable_mosaic.version = 11 : i64} {
  func.func @kernel(%arg0: i32, %arg1: i32, %arg2: memref<1x1x256xf32, #tpu.memory_space<vmem>>, %arg3: memref<1x16x256xf32, #tpu.memory_space<vmem>>, %arg4: memref<8x1xf32, #tpu.memory_space<vmem>>, %arg5: memref<32x16xf32, #tpu.memory_space<vmem>>, %arg6: memref<32x1xf32, #tpu.memory_space<vmem>>, %arg7: memref<32x32xf32, #tpu.memory_space<vmem>>, %arg8: memref<32x1xf32, #tpu.memory_space<vmem>>, %arg9: memref<3x32xf32, #tpu.memory_space<vmem>>, %arg10: memref<3x1xf32, #tpu.memory_space<vmem>>, %arg11: memref<1x3x256xf32, #tpu.memory_space<vmem>>) attributes {dimension_semantics = [#tpu.dimension_semantics<parallel>, #tpu.dimension_semantics<parallel>], iteration_bounds = array<i64: 2, 1>, scalar_prefetch = 0 : i64, scratch_operands = 0 : i64, tpu.core_type = #tpu.core_type<tc>, window_params = [{transform_indices = @transform_0, window_bounds = array<i64: 1, 1, 256>}, {transform_indices = @transform_1, window_bounds = array<i64: 1, 16, 256>}, {pipeline_mode = #tpu.pipeline_mode<synchronous>, transform_indices = @transform_2, window_bounds = array<i64: 8, 1>}, {pipeline_mode = #tpu.pipeline_mode<synchronous>, transform_indices = @transform_3, window_bounds = array<i64: 32, 16>}, {pipeline_mode = #tpu.pipeline_mode<synchronous>, transform_indices = @transform_4, window_bounds = array<i64: 32, 1>}, {pipeline_mode = #tpu.pipeline_mode<synchronous>, transform_indices = @transform_5, window_bounds = array<i64: 32, 32>}, {pipeline_mode = #tpu.pipeline_mode<synchronous>, transform_indices = @transform_6, window_bounds = array<i64: 32, 1>}, {pipeline_mode = #tpu.pipeline_mode<synchronous>, transform_indices = @transform_7, window_bounds = array<i64: 3, 32>}, {pipeline_mode = #tpu.pipeline_mode<synchronous>, transform_indices = @transform_8, window_bounds = array<i64: 3, 1>}, {transform_indices = @transform_9, window_bounds = array<i64: 1, 3, 256>}]} {
    %c0 = arith.constant 0 : index
    %c0_0 = arith.constant 0 : index
    %c0_1 = arith.constant 0 : index
    %0 = vector.load %arg2[%c0, %c0_0, %c0_1] : memref<1x1x256xf32, #tpu.memory_space<vmem>>, vector<1x1x256xf32>
    %1 = vector.shape_cast %0 : vector<1x1x256xf32> to vector<1x256xf32>
    %c0_2 = arith.constant 0 : index
    %c0_3 = arith.constant 0 : index
    %2 = vector.load %arg4[%c0_2, %c0_3] : memref<8x1xf32, #tpu.memory_space<vmem>>, vector<8x1xf32>
    %3 = vector.broadcast %2 : vector<8x1xf32> to vector<8x256xf32>
    %4 = vector.broadcast %1 : vector<1x256xf32> to vector<8x256xf32>
    %5 = arith.mulf %3, %4 : vector<8x256xf32>
    %6 = math.cos %5 : vector<8x256xf32>
    %7 = math.sin %5 : vector<8x256xf32>
    %8 = tpu.concatenate %6, %7 in 0 : vector<8x256xf32>, vector<8x256xf32> -> vector<16x256xf32>
    %c0_4 = arith.constant 0 : index
    %c0_5 = arith.constant 0 : index
    %c0_6 = arith.constant 0 : index
    %9 = vector.load %arg3[%c0_4, %c0_5, %c0_6] : memref<1x16x256xf32, #tpu.memory_space<vmem>>, vector<1x16x256xf32>
    %10 = vector.shape_cast %9 : vector<1x16x256xf32> to vector<16x256xf32>
    %11 = arith.addf %8, %10 : vector<16x256xf32>
    %c0_7 = arith.constant 0 : index
    %c0_8 = arith.constant 0 : index
    %12 = vector.load %arg5[%c0_7, %c0_8] : memref<32x16xf32, #tpu.memory_space<vmem>>, vector<32x16xf32>
    %c0_9 = arith.constant 0 : index
    %c0_10 = arith.constant 0 : index
    %13 = vector.load %arg6[%c0_9, %c0_10] : memref<32x1xf32, #tpu.memory_space<vmem>>, vector<32x1xf32>
    %cst = arith.constant dense<0.000000e+00> : vector<32x256xf32>
    %14 = tpu.matmul %12, %11, %cst {dimension_numbers = #tpu.dot_dimension_numbers<[1], [0], [0], [1], [0, 0, 1, 1], [], []>} : vector<32x16xf32>, vector<16x256xf32>, vector<32x256xf32> -> vector<32x256xf32>
    %15 = vector.broadcast %13 : vector<32x1xf32> to vector<32x256xf32>
    %16 = arith.addf %14, %15 : vector<32x256xf32>
    %cst_11 = arith.constant 0.000000e+00 : f32
    %17 = vector.broadcast %cst_11 : f32 to vector<32x256xf32>
    %18 = arith.maximumf %16, %17 : vector<32x256xf32>
    %c0_12 = arith.constant 0 : index
    %c0_13 = arith.constant 0 : index
    %19 = vector.load %arg7[%c0_12, %c0_13] : memref<32x32xf32, #tpu.memory_space<vmem>>, vector<32x32xf32>
    %c0_14 = arith.constant 0 : index
    %c0_15 = arith.constant 0 : index
    %20 = vector.load %arg8[%c0_14, %c0_15] : memref<32x1xf32, #tpu.memory_space<vmem>>, vector<32x1xf32>
    %cst_16 = arith.constant dense<0.000000e+00> : vector<32x256xf32>
    %21 = tpu.matmul %19, %18, %cst_16 {dimension_numbers = #tpu.dot_dimension_numbers<[1], [0], [0], [1], [0, 0, 1, 1], [], []>} : vector<32x32xf32>, vector<32x256xf32>, vector<32x256xf32> -> vector<32x256xf32>
    %22 = vector.broadcast %20 : vector<32x1xf32> to vector<32x256xf32>
    %23 = arith.addf %21, %22 : vector<32x256xf32>
    %cst_17 = arith.constant 0.000000e+00 : f32
    %24 = vector.broadcast %cst_17 : f32 to vector<32x256xf32>
    %25 = arith.maximumf %23, %24 : vector<32x256xf32>
    %c0_18 = arith.constant 0 : index
    %c0_19 = arith.constant 0 : index
    %26 = vector.load %arg9[%c0_18, %c0_19] : memref<3x32xf32, #tpu.memory_space<vmem>>, vector<3x32xf32>
    %c0_20 = arith.constant 0 : index
    %c0_21 = arith.constant 0 : index
    %27 = vector.load %arg10[%c0_20, %c0_21] : memref<3x1xf32, #tpu.memory_space<vmem>>, vector<3x1xf32>
    %cst_22 = arith.constant dense<0.000000e+00> : vector<3x256xf32>
    %28 = tpu.matmul %26, %25, %cst_22 {dimension_numbers = #tpu.dot_dimension_numbers<[1], [0], [0], [1], [0, 0, 1, 1], [], []>} : vector<3x32xf32>, vector<32x256xf32>, vector<3x256xf32> -> vector<3x256xf32>
    %29 = vector.broadcast %27 : vector<3x1xf32> to vector<3x256xf32>
    %30 = arith.addf %28, %29 : vector<3x256xf32>
    %c0_23 = arith.constant 0 : index
    %c0_24 = arith.constant 0 : index
    %c0_25 = arith.constant 0 : index
    %31 = vector.load %arg11[%c0_23, %c0_24, %c0_25] : memref<1x3x256xf32, #tpu.memory_space<vmem>>, vector<1x3x256xf32>
    %32 = vector.shape_cast %31 : vector<1x3x256xf32> to vector<3x256xf32>
    %33 = vector.shape_cast %30 : vector<3x256xf32> to vector<1x3x256xf32>
    tpu.vector_store %arg11[%c0_23, %c0_24, %c0_25], %33 {strides = array<i32>} : memref<1x3x256xf32, #tpu.memory_space<vmem>>, vector<1x3x256xf32>,
    return
  }
  func.func @transform_0(%arg0: i32, %arg1: i32) -> (i32, i32, i32) {
    %c0_i32 = arith.constant 0 : i32
    %c0_i32_0 = arith.constant 0 : i32
    return %arg0, %c0_i32, %arg1 : i32, i32, i32
  }
  func.func @transform_1(%arg0: i32, %arg1: i32) -> (i32, i32, i32) {
    %c0_i32 = arith.constant 0 : i32
    %c0_i32_0 = arith.constant 0 : i32
    return %arg0, %c0_i32, %arg1 : i32, i32, i32
  }
  func.func @transform_2(%arg0: i32, %arg1: i32) -> (i32, i32) {
    %c0_i32 = arith.constant 0 : i32
    %c0_i32_0 = arith.constant 0 : i32
    %c0_i32_1 = arith.constant 0 : i32
    return %c0_i32, %c0_i32_0 : i32, i32
  }
  func.func @transform_3(%arg0: i32, %arg1: i32) -> (i32, i32) {
    %c0_i32 = arith.constant 0 : i32
    %c0_i32_0 = arith.constant 0 : i32
    %c0_i32_1 = arith.constant 0 : i32
    return %c0_i32, %c0_i32_0 : i32, i32
  }
  func.func @transform_4(%arg0: i32, %arg1: i32) -> (i32, i32) {
    %c0_i32 = arith.constant 0 : i32
    %c0_i32_0 = arith.constant 0 : i32
    %c0_i32_1 = arith.constant 0 : i32
    return %c0_i32, %c0_i32_0 : i32, i32
  }
  func.func @transform_5(%arg0: i32, %arg1: i32) -> (i32, i32) {
    %c0_i32 = arith.constant 0 : i32
    %c0_i32_0 = arith.constant 0 : i32
    %c0_i32_1 = arith.constant 0 : i32
    return %c0_i32, %c0_i32_0 : i32, i32
  }
  func.func @transform_6(%arg0: i32, %arg1: i32) -> (i32, i32) {
    %c0_i32 = arith.constant 0 : i32
    %c0_i32_0 = arith.constant 0 : i32
    %c0_i32_1 = arith.constant 0 : i32
    return %c0_i32, %c0_i32_0 : i32, i32
  }
  func.func @transform_7(%arg0: i32, %arg1: i32) -> (i32, i32) {
    %c0_i32 = arith.constant 0 : i32
    %c0_i32_0 = arith.constant 0 : i32
    %c0_i32_1 = arith.constant 0 : i32
    return %c0_i32, %c0_i32_0 : i32, i32
  }
  func.func @transform_8(%arg0: i32, %arg1: i32) -> (i32, i32) {
    %c0_i32 = arith.constant 0 : i32
    %c0_i32_0 = arith.constant 0 : i32
    %c0_i32_1 = arith.constant 0 : i32
    return %c0_i32, %c0_i32_0 : i32, i32
  }
  func.func @transform_9(%arg0: i32, %arg1: i32) -> (i32, i32, i32) {
    %c0_i32 = arith.constant 0 : i32
    %c0_i32_0 = arith.constant 0 : i32
    return %arg0, %c0_i32, %arg1 : i32, i32, i32
  }
}

</mosaic_0001>

<llo_original>
// kernel: tpu_custom_call.1
$region0: #{tpu_custom_call.1}
  #allocation0 [shape = 'u32[]', space=smem, size = 0x4, offset = 0x4, fixed_abs, tag = 'smem constant byte address 0x4 - core index']
  #allocation1 [shape = 'u32[144,128]{1,0:T(1,128)}', space=vmem, size = 0x12000, scoped, tag = 'internal scratch']
  %s0 = inlined_call_operand.vmem [shape: f32[2,1,256], index: 0, kind: input, shape index: {}]
  %s1 = inlined_call_operand.vmem [shape: f32[2,16,256], index: 1, kind: input, shape index: {}]
  %s2 = inlined_call_operand.vmem [shape: f32[8,1], index: 2, kind: input, shape index: {}]
  %s3 = inlined_call_operand.vmem [shape: f32[32,16], index: 3, kind: input, shape index: {}]
  %s4 = inlined_call_operand.vmem [shape: f32[32,1], index: 4, kind: input, shape index: {}]
  %s5 = inlined_call_operand.vmem [shape: f32[32,32], index: 5, kind: input, shape index: {}]
  %s6 = inlined_call_operand.vmem [shape: f32[32,1], index: 6, kind: input, shape index: {}]
  %s7 = inlined_call_operand.vmem [shape: f32[3,32], index: 7, kind: input, shape index: {}]
  %s8 = inlined_call_operand.vmem [shape: f32[3,1], index: 8, kind: input, shape index: {}]
  %s9 = inlined_call_operand.vmem [shape: f32[2,3,256], index: 9, kind: output, shape index: {}]
  %s10 = sld [smem:[#allocation0]]
  $region69: #{tpu_custom_call.1} parent=0
    _
  %s12 = ssub.s32 1, %s10
  %s13 = scalar_select 0, %s12, %s10
  loop: start=0, step=1, limit=4
  $region2: #{tpu_custom_call.1} parent=0 // loop_pre_header
    _
  $region3: #{tpu_custom_call.1} parent=0 // loop_header
    %s15 = sphi 0, %s19
    %p16 = scmp.ge.s32.totalorder %s15, 4
    %s22 = sphi 0, %s34
    %s23 = sphi 0, %s30
    %s24 = sphi 0, %s22
    %s25 = sphi 0, %s23
    %s26 = sphi 0, %s24
    %s27 = sphi 0, %s25
    %s39 = sphi 0, %s41
    %s42 = sphi 0, %s39
    %s43 = sphi 0, %s42
    %s59 = sphi 0, %s43
    %s67 = sphi 0, %s69
    %s70 = sphi 0, %s67
    %s71 = sphi 0, %s70
    %s87 = sphi 0, %s71
    %s91 = sphi 0, %s91
    %s93 = sphi 0, %s91
    %s94 = sphi 0, %s93
    %s108 = sphi 0, %s94
    %s112 = sphi 0, %s112
    %s114 = sphi 0, %s112
    %s115 = sphi 0, %s114
    %s129 = sphi 0, %s115
    %s133 = sphi 0, %s133
    %s135 = sphi 0, %s133
    %s136 = sphi 0, %s135
    %s150 = sphi 0, %s136
    %s154 = sphi 0, %s154
    %s156 = sphi 0, %s154
    %s157 = sphi 0, %s156
    %s171 = sphi 0, %s157
    %s175 = sphi 0, %s175
    %s177 = sphi 0, %s175
    %s178 = sphi 0, %s177
    %s192 = sphi 0, %s178
    %s196 = sphi 0, %s196
    %s198 = sphi 0, %s196
    %s199 = sphi 0, %s198
    %s213 = sphi 0, %s199
    %s217 = sphi 0, %s217
    %s219 = sphi 0, %s217
    %s220 = sphi 0, %s219
    %s234 = sphi 0, %s220
    %s242 = sphi 0, %s244
    %s245 = sphi 0, %s242
    %s246 = sphi 0, %s245
    %s262 = sphi 0, %s246
  $region4: #{tpu_custom_call.1} parent=0 // loop_header_branch
    %18 = sbr.rel (%p16) target = $region8
  $region5: #{tpu_custom_call.1} parent=0 // loop_body
    %s20 = ssub.s32 %s15, 1
    %s21 = ssub.s32 %s15, 2
    %s28 = sadd.s32 1, %s23
    %p29 = scmp.ge.s32.totalorder %s28, 1
    %s30 = scalar_select %p29, 0, %s28
    %s31 = sadd.s32 1, %s22
    %s32 = scalar_select %p29, %s31, %s22
    %p33 = scmp.ge.s32.totalorder %s32, 2
    %s34 = scalar_select %p33, 0, %s32
    %s35 = ssub.s32 %s22, %s34
    %s36 = ssub.s32 %s23, %s30
    %s37 = sor.u32 %s35, %s36
    %p38 = scmp.eq.s32.totalorder %s37, 0
    %s40 = sadd.s32 %s39, 1
    %s41 = scalar_select %p38, %s39, %s40
    %p44 = pneg %p38
    %p45 = scmp.eq.s32.totalorder %s15, 1
    %p46 = por %p44, %p45
    %p47 = scmp.ne.s32.totalorder %s39, %s42
    %p48 = scmp.eq.s32.totalorder %s15, 0
    %p49 = por %p47, %p48
    %p50 = scmp.ne.s32.totalorder %s39, %s42
    %p51 = scmp.eq.s32.totalorder %s20, 1
    %p52 = por %p50, %p51
    %p53 = scmp.ne.s32.totalorder %s42, %s43
    %p54 = scmp.eq.s32.totalorder %s20, 0
    %p55 = por %p53, %p54
    %p56 = scmp.ne.s32.totalorder %s42, %s43
    %p57 = scmp.eq.s32.totalorder %s21, 1
    %p58 = por %p56, %p57
    %p60 = scmp.ne.s32.totalorder %s43, %s59
    %p61 = scmp.eq.s32.totalorder %s21, 0
    %p62 = por %p60, %p61
    %s63 = ssub.s32 %s22, %s34
    %s64 = ssub.s32 %s23, %s30
    %s65 = sor.u32 %s63, %s64
    %p66 = scmp.eq.s32.totalorder %s65, 0
    %s68 = sadd.s32 %s67, 1
    %s69 = scalar_select %p66, %s67, %s68
    %p72 = pneg %p66
    %p73 = scmp.eq.s32.totalorder %s15, 1
    %p74 = por %p72, %p73
    %p75 = scmp.ne.s32.totalorder %s67, %s70
    %p76 = scmp.eq.s32.totalorder %s15, 0
    %p77 = por %p75, %p76
    %p78 = scmp.ne.s32.totalorder %s67, %s70
    %p79 = scmp.eq.s32.totalorder %s20, 1
    %p80 = por %p78, %p79
    %p81 = scmp.ne.s32.totalorder %s70, %s71
    %p82 = scmp.eq.s32.totalorder %s20, 0
    %p83 = por %p81, %p82
    %p84 = scmp.ne.s32.totalorder %s70, %s71
    %p85 = scmp.eq.s32.totalorder %s21, 1
    %p86 = por %p84, %p85
    %p88 = scmp.ne.s32.totalorder %s71, %s87
    %p89 = scmp.eq.s32.totalorder %s21, 0
    %p90 = por %p88, %p89
    %s92 = sadd.s32 %s91, 1
    %p95 = scmp.eq.s32.totalorder %s15, 1
    %p96 = scmp.ne.s32.totalorder %s91, %s93
    %p97 = scmp.eq.s32.totalorder %s15, 0
    %p98 = por %p96, %p97
    %p99 = scmp.ne.s32.totalorder %s91, %s93
    %p100 = scmp.eq.s32.totalorder %s20, 1
    %p101 = por %p99, %p100
    %p102 = scmp.ne.s32.totalorder %s93, %s94
    %p103 = scmp.eq.s32.totalorder %s20, 0
    %p104 = por %p102, %p103
    %p105 = scmp.ne.s32.totalorder %s93, %s94
    %p106 = scmp.eq.s32.totalorder %s21, 1
    %p107 = por %p105, %p106
    %p109 = scmp.ne.s32.totalorder %s94, %s108
    %p110 = scmp.eq.s32.totalorder %s21, 0
    %p111 = por %p109, %p110
    %s113 = sadd.s32 %s112, 1
    %p116 = scmp.eq.s32.totalorder %s15, 1
    %p117 = scmp.ne.s32.totalorder %s112, %s114
    %p118 = scmp.eq.s32.totalorder %s15, 0
    %p119 = por %p117, %p118
    %p120 = scmp.ne.s32.totalorder %s112, %s114
    %p121 = scmp.eq.s32.totalorder %s20, 1
    %p122 = por %p120, %p121
    %p123 = scmp.ne.s32.totalorder %s114, %s115
    %p124 = scmp.eq.s32.totalorder %s20, 0
    %p125 = por %p123, %p124
    %p126 = scmp.ne.s32.totalorder %s114, %s115
    %p127 = scmp.eq.s32.totalorder %s21, 1
    %p128 = por %p126, %p127
    %p130 = scmp.ne.s32.totalorder %s115, %s129
    %p131 = scmp.eq.s32.totalorder %s21, 0
    %p132 = por %p130, %p131
    %s134 = sadd.s32 %s133, 1
    %p137 = scmp.eq.s32.totalorder %s15, 1
    %p138 = scmp.ne.s32.totalorder %s133, %s135
    %p139 = scmp.eq.s32.totalorder %s15, 0
    %p140 = por %p138, %p139
    %p141 = scmp.ne.s32.totalorder %s133, %s135
    %p142 = scmp.eq.s32.totalorder %s20, 1
    %p143 = por %p141, %p142
    %p144 = scmp.ne.s32.totalorder %s135, %s136
    %p145 = scmp.eq.s32.totalorder %s20, 0
    %p146 = por %p144, %p145
    %p147 = scmp.ne.s32.totalorder %s135, %s136
    %p148 = scmp.eq.s32.totalorder %s21, 1
    %p149 = por %p147, %p148
    %p151 = scmp.ne.s32.totalorder %s136, %s150
    %p152 = scmp.eq.s32.totalorder %s21, 0
    %p153 = por %p151, %p152
    %s155 = sadd.s32 %s154, 1
    %p158 = scmp.eq.s32.totalorder %s15, 1
    %p159 = scmp.ne.s32.totalorder %s154, %s156
    %p160 = scmp.eq.s32.totalorder %s15, 0
    %p161 = por %p159, %p160
    %p162 = scmp.ne.s32.totalorder %s154, %s156
    %p163 = scmp.eq.s32.totalorder %s20, 1
    %p164 = por %p162, %p163
    %p165 = scmp.ne.s32.totalorder %s156, %s157
    %p166 = scmp.eq.s32.totalorder %s20, 0
    %p167 = por %p165, %p166
    %p168 = scmp.ne.s32.totalorder %s156, %s157
    %p169 = scmp.eq.s32.totalorder %s21, 1
    %p170 = por %p168, %p169
    %p172 = scmp.ne.s32.totalorder %s157, %s171
    %p173 = scmp.eq.s32.totalorder %s21, 0
    %p174 = por %p172, %p173
    %s176 = sadd.s32 %s175, 1
    %p179 = scmp.eq.s32.totalorder %s15, 1
    %p180 = scmp.ne.s32.totalorder %s175, %s177
    %p181 = scmp.eq.s32.totalorder %s15, 0
    %p182 = por %p180, %p181
    %p183 = scmp.ne.s32.totalorder %s175, %s177
    %p184 = scmp.eq.s32.totalorder %s20, 1
    %p185 = por %p183, %p184
    %p186 = scmp.ne.s32.totalorder %s177, %s178
    %p187 = scmp.eq.s32.totalorder %s20, 0
    %p188 = por %p186, %p187
    %p189 = scmp.ne.s32.totalorder %s177, %s178
    %p190 = scmp.eq.s32.totalorder %s21, 1
    %p191 = por %p189, %p190
    %p193 = scmp.ne.s32.totalorder %s178, %s192
    %p194 = scmp.eq.s32.totalorder %s21, 0
    %p195 = por %p193, %p194
    %s197 = sadd.s32 %s196, 1
    %p200 = scmp.eq.s32.totalorder %s15, 1
    %p201 = scmp.ne.s32.totalorder %s196, %s198
    %p202 = scmp.eq.s32.totalorder %s15, 0
    %p203 = por %p201, %p202
    %p204 = scmp.ne.s32.totalorder %s196, %s198
    %p205 = scmp.eq.s32.totalorder %s20, 1
    %p206 = por %p204, %p205
    %p207 = scmp.ne.s32.totalorder %s198, %s199
    %p208 = scmp.eq.s32.totalorder %s20, 0
    %p209 = por %p207, %p208
    %p210 = scmp.ne.s32.totalorder %s198, %s199
    %p211 = scmp.eq.s32.totalorder %s21, 1
    %p212 = por %p210, %p211
    %p214 = scmp.ne.s32.totalorder %s199, %s213
    %p215 = scmp.eq.s32.totalorder %s21, 0
    %p216 = por %p214, %p215
    %s218 = sadd.s32 %s217, 1
    %p221 = scmp.eq.s32.totalorder %s15, 1
    %p222 = scmp.ne.s32.totalorder %s217, %s219
    %p223 = scmp.eq.s32.totalorder %s15, 0
    %p224 = por %p222, %p223
    %p225 = scmp.ne.s32.totalorder %s217, %s219
    %p226 = scmp.eq.s32.totalorder %s20, 1
    %p227 = por %p225, %p226
    %p228 = scmp.ne.s32.totalorder %s219, %s220
    %p229 = scmp.eq.s32.totalorder %s20, 0
    %p230 = por %p228, %p229
    %p231 = scmp.ne.s32.totalorder %s219, %s220
    %p232 = scmp.eq.s32.totalorder %s21, 1
    %p233 = por %p231, %p232
    %p235 = scmp.ne.s32.totalorder %s220, %s234
    %p236 = scmp.eq.s32.totalorder %s21, 0
    %p237 = por %p235, %p236
    %s238 = ssub.s32 %s22, %s34
    %s239 = ssub.s32 %s23, %s30
    %s240 = sor.u32 %s238, %s239
    %p241 = scmp.eq.s32.totalorder %s240, 0
    %s243 = sadd.s32 %s242, 1
    %s244 = scalar_select %p241, %s242, %s243
    %p247 = pneg %p241
    %p248 = scmp.eq.s32.totalorder %s15, 1
    %p249 = por %p247, %p248
    %p250 = scmp.ne.s32.totalorder %s242, %s245
    %p251 = scmp.eq.s32.totalorder %s15, 0
    %p252 = por %p250, %p251
    %p253 = scmp.ne.s32.totalorder %s242, %s245
    %p254 = scmp.eq.s32.totalorder %s20, 1
    %p255 = por %p253, %p254
    %p256 = scmp.ne.s32.totalorder %s245, %s246
    %p257 = scmp.eq.s32.totalorder %s20, 0
    %p258 = por %p256, %p257
    %p259 = scmp.ne.s32.totalorder %s245, %s246
    %p260 = scmp.eq.s32.totalorder %s21, 1
    %p261 = por %p259, %p260
    %p263 = scmp.ne.s32.totalorder %s246, %s262
    %p264 = scmp.eq.s32.totalorder %s21, 0
    %p265 = por %p263, %p264
    %p266 = scmp.le.s32.totalorder 1, %s15
    %p267 = scmp.lt.s32.totalorder %s15, 3
    %p268 = pnand %p266, %p267
    %p269 = pneg %p268
    // Predicated region
    $region9: #{tpu_custom_call.1} parent=5 // pred_check
      _
    $region10: #{tpu_custom_call.1} parent=5 // pred_check_branch
      %271 = sbr.rel (%p268) target = $region12
    $region11: #{tpu_custom_call.1} parent=5 // pred_region
      %s272 = ssub.s32 %s15, 1
      // Predicated region
      $region13: #{tpu_custom_call.1} parent=11 // pred_check
        %p273 = pneg %p104
      $region14: #{tpu_custom_call.1} parent=11 // pred_check_branch
        %275 = sbr.rel (%p273) target = $region16
      $region15: #{tpu_custom_call.1} parent=11 // pred_region
        _
      $region16: #{tpu_custom_call.1} parent=11 // pred_fallthru
        _
      // Predicated region
      $region17: #{tpu_custom_call.1} parent=11 // pred_check
        %p276 = pneg %p125
      $region18: #{tpu_custom_call.1} parent=11 // pred_check_branch
        %278 = sbr.rel (%p276) target = $region20
      $region19: #{tpu_custom_call.1} parent=11 // pred_region
        _
      $region20: #{tpu_custom_call.1} parent=11 // pred_fallthru
        _
      // Predicated region
      $region21: #{tpu_custom_call.1} parent=11 // pred_check
        %p279 = pneg %p146
      $region22: #{tpu_custom_call.1} parent=11 // pred_check_branch
        %281 = sbr.rel (%p279) target = $region24
      $region23: #{tpu_custom_call.1} parent=11 // pred_region
        _
      $region24: #{tpu_custom_call.1} parent=11 // pred_fallthru
        _
      // Predicated region
      $region25: #{tpu_custom_call.1} parent=11 // pred_check
        %p282 = pneg %p167
      $region26: #{tpu_custom_call.1} parent=11 // pred_check_branch
        %284 = sbr.rel (%p282) target = $region28
      $region27: #{tpu_custom_call.1} parent=11 // pred_region
        _
      $region28: #{tpu_custom_call.1} parent=11 // pred_fallthru
        _
      // Predicated region
      $region29: #{tpu_custom_call.1} parent=11 // pred_check
        %p285 = pneg %p188
      $region30: #{tpu_custom_call.1} parent=11 // pred_check_branch
        %287 = sbr.rel (%p285) target = $region32
      $region31: #{tpu_custom_call.1} parent=11 // pred_region
        _
      $region32: #{tpu_custom_call.1} parent=11 // pred_fallthru
        _
      // Predicated region
      $region33: #{tpu_custom_call.1} parent=11 // pred_check
        %p288 = pneg %p209
      $region34: #{tpu_custom_call.1} parent=11 // pred_check_branch
        %290 = sbr.rel (%p288) target = $region36
      $region35: #{tpu_custom_call.1} parent=11 // pred_region
        _
      $region36: #{tpu_custom_call.1} parent=11 // pred_fallthru
        _
      // Predicated region
      $region37: #{tpu_custom_call.1} parent=11 // pred_check
        %p291 = pneg %p230
      $region38: #{tpu_custom_call.1} parent=11 // pred_check_branch
        %293 = sbr.rel (%p291) target = $region40
      $region39: #{tpu_custom_call.1} parent=11 // pred_region
        _
      $region40: #{tpu_custom_call.1} parent=11 // pred_fallthru
        _
    $region12: #{tpu_custom_call.1} parent=5 // pred_fallthru
      _
    %p294 = scmp.lt.s32.totalorder %s15, 2
    // Predicated region
    $region41: #{tpu_custom_call.1} parent=5 // pred_check
      %p295 = pneg %p294
    $region42: #{tpu_custom_call.1} parent=5 // pred_check_branch
      %297 = sbr.rel (%p295) target = $region44
    $region43: #{tpu_custom_call.1} parent=5 // pred_region
      // Predicated region
      $region45: #{tpu_custom_call.1} parent=43 // pred_check
        %p298 = pneg %p49
      $region46: #{tpu_custom_call.1} parent=43 // pred_check_branch
        %300 = sbr.rel (%p298) target = $region48
      $region47: #{tpu_custom_call.1} parent=43 // pred_region
        %s301 = smul.u32 2, %s23
        %p302 = scmp.lt.s32.totalorder %s22, 1
        %s303 = scalar_select %p302, %s22, 1
        %p304 = scmp.lt.s32.totalorder %s301, 1
        %s305 = scalar_select %p304, %s301, 1
        %s306 = smul.addr %s303, 2
        %s307 = sadd.s32 %s305, %s306
        %s308 = scalar_lea.vmem %s0, %s307
        %s309 = smul.u32 2, %s23
      $region48: #{tpu_custom_call.1} parent=43 // pred_fallthru
        _
      // Predicated region
      $region49: #{tpu_custom_call.1} parent=43 // pred_check
        %p310 = pneg %p77
      $region50: #{tpu_custom_call.1} parent=43 // pred_check_branch
        %312 = sbr.rel (%p310) target = $region52
      $region51: #{tpu_custom_call.1} parent=43 // pred_region
        %s313 = smul.u32 2, %s23
        %p314 = scmp.lt.s32.totalorder %s22, 1
        %s315 = scalar_select %p314, %s22, 1
        %p316 = scmp.lt.s32.totalorder %s313, 1
        %s317 = scalar_select %p316, %s313, 1
        %s318 = smul.addr %s315, 4
        %s319 = sadd.s32 %s317, %s318
        %s320 = smul.addr %s319, 8
        %s321 = scalar_lea.vmem %s1, %s320
        %s322 = smul.u32 2, %s23
      $region52: #{tpu_custom_call.1} parent=43 // pred_fallthru
        _
    $region44: #{tpu_custom_call.1} parent=5 // pred_fallthru
      _
    %p323 = scmp.le.s32.totalorder 1, %s15
    %p324 = scmp.lt.s32.totalorder %s15, 3
    %p325 = pnand %p323, %p324
    %p326 = pneg %p325
    // Predicated region
    $region53: #{tpu_custom_call.1} parent=5 // pred_check
      _
    $region54: #{tpu_custom_call.1} parent=5 // pred_check_branch
      %328 = sbr.rel (%p325) target = $region56
    $region55: #{tpu_custom_call.1} parent=5 // pred_region
      %s329 = ssub.s32 %s15, 1
      %s330 = smul.u32 2, %s25
      %p331 = scmp.lt.s32.totalorder %s24, 1
      %s332 = scalar_select %p331, %s24, 1
      %p333 = scmp.lt.s32.totalorder %s330, 1
      %s334 = scalar_select %p333, %s330, 1
      %s335 = smul.addr %s332, 2
      %s336 = sadd.s32 %s334, %s335
      %s337 = scalar_lea.vmem %s0, %s336
      %p338 = pneg %p55
      %p339 = pneg %p52
      %s340 = smul.u32 2, %s25
      %p341 = scmp.lt.s32.totalorder %s24, 1
      %s342 = scalar_select %p341, %s24, 1
      %p343 = scmp.lt.s32.totalorder %s340, 1
      %s344 = scalar_select %p343, %s340, 1
      %s345 = smul.addr %s342, 4
      %s346 = sadd.s32 %s344, %s345
      %s347 = smul.addr %s346, 8
      %s348 = scalar_lea.vmem %s1, %s347
      %p349 = pneg %p83
      %p350 = pneg %p80
      %p351 = pneg %p104
      %p352 = pneg %p101
      %p353 = pneg %p125
      %p354 = pneg %p122
      %p355 = pneg %p146
      %p356 = pneg %p143
      %p357 = pneg %p167
      %p358 = pneg %p164
      %p359 = pneg %p188
      %p360 = pneg %p185
      %p361 = pneg %p209
      %p362 = pneg %p206
      %p363 = pneg %p230
      %p364 = pneg %p227
      %p365 = pneg %p258
      %p366 = pneg %p255
      %s367 = smul.u32 2, %s25
      %p368 = scmp.lt.s32.totalorder %s24, 1
      %s369 = scalar_select %p368, %s24, 1
      %p370 = scmp.lt.s32.totalorder %s367, 1
      %s371 = scalar_select %p370, %s367, 1
      %s372 = smul.addr %s369, 2
      %s373 = sadd.s32 %s371, %s372
      %s374 = smul.addr %s373, 4
      %s375 = scalar_lea.vmem %s9, %s374
      %s376 = smul.u32 2, %s25
      %p377 = scmp.lt.s32.totalorder %s24, 1
      %s378 = scalar_select %p377, %s24, 1
      %p379 = scmp.lt.s32.totalorder %s376, 1
      %s380 = scalar_select %p379, %s376, 1
      %s381 = smul.addr %s378, 2
      %s382 = sadd.s32 %s380, %s381
      %s383 = scalar_lea.vmem %s0, %s382
      %s384 = smul.u32 2, %s25
      %s385 = smul.u32 2, %s25
      %p386 = scmp.lt.s32.totalorder %s24, 1
      %s387 = scalar_select %p386, %s24, 1
      %p388 = scmp.lt.s32.totalorder %s385, 1
      %s389 = scalar_select %p388, %s385, 1
      %s390 = smul.addr %s387, 4
      %s391 = sadd.s32 %s389, %s390
      %s392 = smul.addr %s391, 8
      %s393 = scalar_lea.vmem %s1, %s392
      %s394 = smul.u32 2, %s25
      %s395 = smul.u32 2, %s25
      %p396 = scmp.lt.s32.totalorder %s24, 1
      %s397 = scalar_select %p396, %s24, 1
      %p398 = scmp.lt.s32.totalorder %s395, 1
      %s399 = scalar_select %p398, %s395, 1
      %s400 = smul.addr %s397, 2
      %s401 = sadd.s32 %s399, %s400
      %s402 = smul.addr %s401, 4
      %s403 = scalar_lea.vmem %s9, %s402
      %s404 = smul.u32 2, %s25
      %v405 = vld [vmem:[%s383] sm:$0x3]
      %v406 = vld [vmem:[%s2] sm:$0xff]
      %408 = vset.pattern.permute.xlu0 0
      %409 = vperm.xlu0 %408, %v406
      %v410 = vpop.permute.xlu0 %409
      %v413 = vlaneseq
      %v414 = vshrl.u32 %v413, 7
      %v415 = vsub.s32 0, %v414
      %v416 = vrot.slane %v405, %v415
      %v417 = vlaneseq
      %v418 = vshrl.u32 %v417, 7
      %v419 = vsub.s32 1, %v418
      %v420 = vrot.slane %v405, %v419
      %v423 = vmul.f32 %v410, %v416
      %v424 = vmul.f32 %v410, %v420
      %v425 = vand.u32 2147483647, %v423
      %vm426 = vcmp.le.f32.partialorder %v425, 0.7853982
      %vm427 = vcmp.lt.s32.totalorder %v423, 0
      %v428 = vand.u32 %v423, 2139095040
      %v429 = vshrl.u32 %v428, 23
      %v430 = vsub.s32 %v429, 127
      %v431 = vand.u32 2147483647, %v423
      %v432 = vand.u32 %v431, 8388607
      %v433 = vor.u32 %v432, 8388608
      %v434 = vsub.s32 0, %v433
      %v435 = vadd.s32 %v430, 1
      %vm436 = vcmp.gt.s32.totalorder %v435, 0
      %v437 = vsel %vm436, %v435, 0
      %v438 = vshrl.u32 %v437, 5
      %v439 = vand.u32 %v437, 31
      %v440 = vsub.s32 32, %v439
      %v441 = vshrl.u32 683565275, %v440
      %v442 = vshll.u32 683565275, %v439
      %v443 = vshrl.u32 2475754826, %v440
      %v444 = vor.u32 %v442, %v443
      %v445 = vshll.u32 2475754826, %v439
      %v446 = vshrl.u32 2131351028, %v440
      %v447 = vor.u32 %v445, %v446
      %v448 = vshll.u32 2131351028, %v439
      %v449 = vshrl.u32 2102212464, %v440
      %v450 = vor.u32 %v448, %v449
      %v451 = vshll.u32 2102212464, %v439
      %v452 = vshrl.u32 920167782, %v440
      %v453 = vor.u32 %v451, %v452
      %v454 = vshll.u32 920167782, %v439
      %v455 = vshrl.u32 1326507024, %v440
      %v456 = vor.u32 %v454, %v455
      %vm457 = vcmp.lt.s32.totalorder %v438, 1
      %vm458 = vcmp.lt.s32.totalorder %v438, 2
      %vm459 = vcmp.lt.s32.totalorder %v438, 3
      %vm460 = vcmp.lt.s32.totalorder %v438, 4
      %v461 = vsel %vm457, %v441, %v444
      %v462 = vsel %vm460, %v450, 2102212464
      %v463 = vsel %vm459, %v447, %v462
      %v464 = vsel %vm458, %v461, %v463
      %v465 = vsel %vm457, %v444, %v447
      %v466 = vsel %vm460, %v453, 920167782
      %v467 = vsel %vm459, %v450, %v466
      %v468 = vsel %vm458, %v465, %v467
      %v469 = vsel %vm457, %v447, %v450
      %v470 = vsel %vm460, %v456, 1326507024
      %v471 = vsel %vm459, %v453, %v470
      %v472 = vsel %vm458, %v469, %v471
      %v473 = vshll.u32 %v433, 8
      %v474 = vmul.u32.u64.compose %v473, %v472
      %v475 = vextract.low.u32 %v474
      %v476 = vextract.high.u32 %v474
      %v477 = vmul.u32.u64.compose %v473, %v468
      %v478 = vextract.low.u32 %v477
      %v479 = vextract.high.u32 %v477
      %v480 = vmul.u32 %v473, %v464
      %v481 = vadd.s32 %v476, %v478
      %vm482 = vc.u32 %v476, %v478
      %v483 = vadd.s32 %v479, 1
      %v484 = vsel %vm482, %v483, %v479
      %v485 = vadd.s32 %v480, %v484
      %v486 = vadd.s32 %v485, 536870912
      %v487 = vshrl.u32 %v486, 30
      %v488 = vshll.u32 %v487, 30
      %v489 = vsub.s32 %v485, %v488
      %vm490 = vcmp.lt.s32.totalorder %v489, 0
      %v491 = vsub.s32 0, %v489
      %v492 = vsel %vm490, %v491, %v489
      %v493 = vclz %v492
      %v494 = vsub.s32 %v493, 2
      %vm495 = vcmp.gt.s32.totalorder 0, %v494
      %v496 = vsel %vm495, 0, %v494
      %v497 = vsub.s32 32, %v496
      %v498 = vshll.u32 %v489, %v496
      %v499 = vshrl.u32 %v481, %v497
      %v500 = vor.u32 %v498, %v499
      %v501 = vsub.s32 4294967266, %v496
      %v502 = vadd.s32 %v501, 127
      %v503 = vshll.u32 %v502, 23
      %v504 = vor.u32 4788187, %v503
      %v505 = vand.u32 2147483647, %v504
      %v507 = vcvt.s32.f32 %v500
      %v508 = vmul.f32 %v507, %v505
      %v509 = vxor.u32 %v508, 2147483648
      %v510 = vsel %vm427, %v509, %v508
      %v511 = vsub.s32 4, %v487
      %v512 = vsel %vm427, %v511, %v487
      %v513 = vsel %vm426, %v423, %v510
      %v514 = vsel %vm426, 0, %v512
      %v515 = vcosq.f32.pop %v513
      %v516 = vsinq.f32.pop %v513
      %vm517 = vweird.f32 %v423
      %v518 = vand.u32 %v514, 3
      %vm519 = vcmp.lt.s32.totalorder %v518, 2
      %vm520 = vcmp.eq.s32.totalorder %v518, 0
      %v521 = vxor.u32 %v516, 2147483648
      %v522 = vsel %vm520, %v515, %v521
      %vm523 = vcmp.eq.s32.totalorder %v518, 2
      %v524 = vxor.u32 %v515, 2147483648
      %v525 = vsel %vm523, %v524, %v516
      %v526 = vsel %vm519, %v522, %v525
      %v527 = vsel %vm517, nan, %v526
      %v528 = vand.u32 2147483647, %v424
      %vm529 = vcmp.le.f32.partialorder %v528, 0.7853982
      %vm530 = vcmp.lt.s32.totalorder %v424, 0
      %v531 = vand.u32 %v424, 2139095040
      %v532 = vshrl.u32 %v531, 23
      %v533 = vsub.s32 %v532, 127
      %v534 = vand.u32 2147483647, %v424
      %v535 = vand.u32 %v534, 8388607
      %v536 = vor.u32 %v535, 8388608
      %v537 = vsub.s32 0, %v536
      %v538 = vadd.s32 %v533, 1
      %vm539 = vcmp.gt.s32.totalorder %v538, 0
      %v540 = vsel %vm539, %v538, 0
      %v541 = vshrl.u32 %v540, 5
      %v542 = vand.u32 %v540, 31
      %v543 = vsub.s32 32, %v542
      %v544 = vshrl.u32 683565275, %v543
      %v545 = vshll.u32 683565275, %v542
      %v546 = vshrl.u32 2475754826, %v543
      %v547 = vor.u32 %v545, %v546
      %v548 = vshll.u32 2475754826, %v542
      %v549 = vshrl.u32 2131351028, %v543
      %v550 = vor.u32 %v548, %v549
      %v551 = vshll.u32 2131351028, %v542
      %v552 = vshrl.u32 2102212464, %v543
      %v553 = vor.u32 %v551, %v552
      %v554 = vshll.u32 2102212464, %v542
      %v555 = vshrl.u32 920167782, %v543
      %v556 = vor.u32 %v554, %v555
      %v557 = vshll.u32 920167782, %v542
      %v558 = vshrl.u32 1326507024, %v543
      %v559 = vor.u32 %v557, %v558
      %vm560 = vcmp.lt.s32.totalorder %v541, 1
      %vm561 = vcmp.lt.s32.totalorder %v541, 2
      %vm562 = vcmp.lt.s32.totalorder %v541, 3
      %vm563 = vcmp.lt.s32.totalorder %v541, 4
      %v564 = vsel %vm560, %v544, %v547
      %v565 = vsel %vm563, %v553, 2102212464
      %v566 = vsel %vm562, %v550, %v565
      %v567 = vsel %vm561, %v564, %v566
      %v568 = vsel %vm560, %v547, %v550
      %v569 = vsel %vm563, %v556, 920167782
      %v570 = vsel %vm562, %v553, %v569
      %v571 = vsel %vm561, %v568, %v570
      %v572 = vsel %vm560, %v550, %v553
      %v573 = vsel %vm563, %v559, 1326507024
      %v574 = vsel %vm562, %v556, %v573
      %v575 = vsel %vm561, %v572, %v574
      %v576 = vshll.u32 %v536, 8
      %v577 = vmul.u32.u64.compose %v576, %v575
      %v578 = vextract.low.u32 %v577
      %v579 = vextract.high.u32 %v577
      %v580 = vmul.u32.u64.compose %v576, %v571
      %v581 = vextract.low.u32 %v580
      %v582 = vextract.high.u32 %v580
      %v583 = vmul.u32 %v576, %v567
      %v584 = vadd.s32 %v579, %v581
      %vm585 = vc.u32 %v579, %v581
      %v586 = vadd.s32 %v582, 1
      %v587 = vsel %vm585, %v586, %v582
      %v588 = vadd.s32 %v583, %v587
      %v589 = vadd.s32 %v588, 536870912
      %v590 = vshrl.u32 %v589, 30
      %v591 = vshll.u32 %v590, 30
      %v592 = vsub.s32 %v588, %v591
      %vm593 = vcmp.lt.s32.totalorder %v592, 0
      %v594 = vsub.s32 0, %v592
      %v595 = vsel %vm593, %v594, %v592
      %v596 = vclz %v595
      %v597 = vsub.s32 %v596, 2
      %vm598 = vcmp.gt.s32.totalorder 0, %v597
      %v599 = vsel %vm598, 0, %v597
      %v600 = vsub.s32 32, %v599
      %v601 = vshll.u32 %v592, %v599
      %v602 = vshrl.u32 %v584, %v600
      %v603 = vor.u32 %v601, %v602
      %v604 = vsub.s32 4294967266, %v599
      %v605 = vadd.s32 %v604, 127
      %v606 = vshll.u32 %v605, 23
      %v607 = vor.u32 4788187, %v606
      %v608 = vand.u32 2147483647, %v607
      %v610 = vcvt.s32.f32 %v603
      %v611 = vmul.f32 %v610, %v608
      %v612 = vxor.u32 %v611, 2147483648
      %v613 = vsel %vm530, %v612, %v611
      %v614 = vsub.s32 4, %v590
      %v615 = vsel %vm530, %v614, %v590
      %v616 = vsel %vm529, %v424, %v613
      %v617 = vsel %vm529, 0, %v615
      %v618 = vcosq.f32.pop %v616
      %v619 = vsinq.f32.pop %v616
      %vm620 = vweird.f32 %v424
      %v621 = vand.u32 %v617, 3
      %vm622 = vcmp.lt.s32.totalorder %v621, 2
      %vm623 = vcmp.eq.s32.totalorder %v621, 0
      %v624 = vxor.u32 %v619, 2147483648
      %v625 = vsel %vm623, %v618, %v624
      %vm626 = vcmp.eq.s32.totalorder %v621, 2
      %v627 = vxor.u32 %v618, 2147483648
      %v628 = vsel %vm626, %v627, %v619
      %v629 = vsel %vm622, %v625, %v628
      %v630 = vsel %vm620, nan, %v629
      %v631 = vand.u32 2147483647, %v423
      %vm632 = vcmp.le.f32.partialorder %v631, 0.7853982
      %vm633 = vcmp.lt.s32.totalorder %v423, 0
      %v634 = vand.u32 %v423, 2139095040
      %v635 = vshrl.u32 %v634, 23
      %v636 = vsub.s32 %v635, 127
      %v637 = vand.u32 2147483647, %v423
      %v638 = vand.u32 %v637, 8388607
      %v639 = vor.u32 %v638, 8388608
      %v640 = vsub.s32 0, %v639
      %v641 = vadd.s32 %v636, 1
      %vm642 = vcmp.gt.s32.totalorder %v641, 0
      %v643 = vsel %vm642, %v641, 0
      %v644 = vshrl.u32 %v643, 5
      %v645 = vand.u32 %v643, 31
      %v646 = vsub.s32 32, %v645
      %v647 = vshrl.u32 683565275, %v646
      %v648 = vshll.u32 683565275, %v645
      %v649 = vshrl.u32 2475754826, %v646
      %v650 = vor.u32 %v648, %v649
      %v651 = vshll.u32 2475754826, %v645
      %v652 = vshrl.u32 2131351028, %v646
      %v653 = vor.u32 %v651, %v652
      %v654 = vshll.u32 2131351028, %v645
      %v655 = vshrl.u32 2102212464, %v646
      %v656 = vor.u32 %v654, %v655
      %v657 = vshll.u32 2102212464, %v645
      %v658 = vshrl.u32 920167782, %v646
      %v659 = vor.u32 %v657, %v658
      %v660 = vshll.u32 920167782, %v645
      %v661 = vshrl.u32 1326507024, %v646
      %v662 = vor.u32 %v660, %v661
      %vm663 = vcmp.lt.s32.totalorder %v644, 1
      %vm664 = vcmp.lt.s32.totalorder %v644, 2
      %vm665 = vcmp.lt.s32.totalorder %v644, 3
      %vm666 = vcmp.lt.s32.totalorder %v644, 4
      %v667 = vsel %vm663, %v647, %v650
      %v668 = vsel %vm666, %v656, 2102212464
      %v669 = vsel %vm665, %v653, %v668
      %v670 = vsel %vm664, %v667, %v669
      %v671 = vsel %vm663, %v650, %v653
      %v672 = vsel %vm666, %v659, 920167782
      %v673 = vsel %vm665, %v656, %v672
      %v674 = vsel %vm664, %v671, %v673
      %v675 = vsel %vm663, %v653, %v656
      %v676 = vsel %vm666, %v662, 1326507024
      %v677 = vsel %vm665, %v659, %v676
      %v678 = vsel %vm664, %v675, %v677
      %v679 = vshll.u32 %v639, 8
      %v680 = vmul.u32.u64.compose %v679, %v678
      %v681 = vextract.low.u32 %v680
      %v682 = vextract.high.u32 %v680
      %v683 = vmul.u32.u64.compose %v679, %v674
      %v684 = vextract.low.u32 %v683
      %v685 = vextract.high.u32 %v683
      %v686 = vmul.u32 %v679, %v670
      %v687 = vadd.s32 %v682, %v684
      %vm688 = vc.u32 %v682, %v684
      %v689 = vadd.s32 %v685, 1
      %v690 = vsel %vm688, %v689, %v685
      %v691 = vadd.s32 %v686, %v690
      %v692 = vadd.s32 %v691, 536870912
      %v693 = vshrl.u32 %v692, 30
      %v694 = vshll.u32 %v693, 30
      %v695 = vsub.s32 %v691, %v694
      %vm696 = vcmp.lt.s32.totalorder %v695, 0
      %v697 = vsub.s32 0, %v695
      %v698 = vsel %vm696, %v697, %v695
      %v699 = vclz %v698
      %v700 = vsub.s32 %v699, 2
      %vm701 = vcmp.gt.s32.totalorder 0, %v700
      %v702 = vsel %vm701, 0, %v700
      %v703 = vsub.s32 32, %v702
      %v704 = vshll.u32 %v695, %v702
      %v705 = vshrl.u32 %v687, %v703
      %v706 = vor.u32 %v704, %v705
      %v707 = vsub.s32 4294967266, %v702
      %v708 = vadd.s32 %v707, 127
      %v709 = vshll.u32 %v708, 23
      %v710 = vor.u32 4788187, %v709
      %v711 = vand.u32 2147483647, %v710
      %v713 = vcvt.s32.f32 %v706
      %v714 = vmul.f32 %v713, %v711
      %v715 = vxor.u32 %v714, 2147483648
      %v716 = vsel %vm633, %v715, %v714
      %v717 = vsub.s32 4, %v693
      %v718 = vsel %vm633, %v717, %v693
      %v719 = vsel %vm632, %v423, %v716
      %v720 = vsel %vm632, 0, %v718
      %v721 = vcosq.f32.pop %v719
      %v722 = vsinq.f32.pop %v719
      %vm723 = vweird.f32 %v423
      %v724 = vadd.s32 %v720, 3
      %v725 = vand.u32 %v724, 3
      %vm726 = vcmp.lt.s32.totalorder %v725, 2
      %vm727 = vcmp.eq.s32.totalorder %v725, 0
      %v728 = vxor.u32 %v722, 2147483648
      %v729 = vsel %vm727, %v721, %v728
      %vm730 = vcmp.eq.s32.totalorder %v725, 2
      %v731 = vxor.u32 %v721, 2147483648
      %v732 = vsel %vm730, %v731, %v722
      %v733 = vsel %vm726, %v729, %v732
      %v734 = vsel %vm723, nan, %v733
      %v735 = vand.u32 2147483647, %v424
      %vm736 = vcmp.le.f32.partialorder %v735, 0.7853982
      %vm737 = vcmp.lt.s32.totalorder %v424, 0
      %v738 = vand.u32 %v424, 2139095040
      %v739 = vshrl.u32 %v738, 23
      %v740 = vsub.s32 %v739, 127
      %v741 = vand.u32 2147483647, %v424
      %v742 = vand.u32 %v741, 8388607
      %v743 = vor.u32 %v742, 8388608
      %v744 = vsub.s32 0, %v743
      %v745 = vadd.s32 %v740, 1
      %vm746 = vcmp.gt.s32.totalorder %v745, 0
      %v747 = vsel %vm746, %v745, 0
      %v748 = vshrl.u32 %v747, 5
      %v749 = vand.u32 %v747, 31
      %v750 = vsub.s32 32, %v749
      %v751 = vshrl.u32 683565275, %v750
      %v752 = vshll.u32 683565275, %v749
      %v753 = vshrl.u32 2475754826, %v750
      %v754 = vor.u32 %v752, %v753
      %v755 = vshll.u32 2475754826, %v749
      %v756 = vshrl.u32 2131351028, %v750
      %v757 = vor.u32 %v755, %v756
      %v758 = vshll.u32 2131351028, %v749
      %v759 = vshrl.u32 2102212464, %v750
      %v760 = vor.u32 %v758, %v759
      %v761 = vshll.u32 2102212464, %v749
      %v762 = vshrl.u32 920167782, %v750
      %v763 = vor.u32 %v761, %v762
      %v764 = vshll.u32 920167782, %v749
      %v765 = vshrl.u32 1326507024, %v750
      %v766 = vor.u32 %v764, %v765
      %vm767 = vcmp.lt.s32.totalorder %v748, 1
      %vm768 = vcmp.lt.s32.totalorder %v748, 2
      %vm769 = vcmp.lt.s32.totalorder %v748, 3
      %vm770 = vcmp.lt.s32.totalorder %v748, 4
      %v771 = vsel %vm767, %v751, %v754
      %v772 = vsel %vm770, %v760, 2102212464
      %v773 = vsel %vm769, %v757, %v772
      %v774 = vsel %vm768, %v771, %v773
      %v775 = vsel %vm767, %v754, %v757
      %v776 = vsel %vm770, %v763, 920167782
      %v777 = vsel %vm769, %v760, %v776
      %v778 = vsel %vm768, %v775, %v777
      %v779 = vsel %vm767, %v757, %v760
      %v780 = vsel %vm770, %v766, 1326507024
      %v781 = vsel %vm769, %v763, %v780
      %v782 = vsel %vm768, %v779, %v781
      %v783 = vshll.u32 %v743, 8
      %v784 = vmul.u32.u64.compose %v783, %v782
      %v785 = vextract.low.u32 %v784
      %v786 = vextract.high.u32 %v784
      %v787 = vmul.u32.u64.compose %v783, %v778
      %v788 = vextract.low.u32 %v787
      %v789 = vextract.high.u32 %v787
      %v790 = vmul.u32 %v783, %v774
      %v791 = vadd.s32 %v786, %v788
      %vm792 = vc.u32 %v786, %v788
      %v793 = vadd.s32 %v789, 1
      %v794 = vsel %vm792, %v793, %v789
      %v795 = vadd.s32 %v790, %v794
      %v796 = vadd.s32 %v795, 536870912
      %v797 = vshrl.u32 %v796, 30
      %v798 = vshll.u32 %v797, 30
      %v799 = vsub.s32 %v795, %v798
      %vm800 = vcmp.lt.s32.totalorder %v799, 0
      %v801 = vsub.s32 0, %v799
      %v802 = vsel %vm800, %v801, %v799
      %v803 = vclz %v802
      %v804 = vsub.s32 %v803, 2
      %vm805 = vcmp.gt.s32.totalorder 0, %v804
      %v806 = vsel %vm805, 0, %v804
      %v807 = vsub.s32 32, %v806
      %v808 = vshll.u32 %v799, %v806
      %v809 = vshrl.u32 %v791, %v807
      %v810 = vor.u32 %v808, %v809
      %v811 = vsub.s32 4294967266, %v806
      %v812 = vadd.s32 %v811, 127
      %v813 = vshll.u32 %v812, 23
      %v814 = vor.u32 4788187, %v813
      %v815 = vand.u32 2147483647, %v814
      %v817 = vcvt.s32.f32 %v810
      %v818 = vmul.f32 %v817, %v815
      %v819 = vxor.u32 %v818, 2147483648
      %v820 = vsel %vm737, %v819, %v818
      %v821 = vsub.s32 4, %v797
      %v822 = vsel %vm737, %v821, %v797
      %v823 = vsel %vm736, %v424, %v820
      %v824 = vsel %vm736, 0, %v822
      %v825 = vcosq.f32.pop %v823
      %v826 = vsinq.f32.pop %v823
      %vm827 = vweird.f32 %v424
      %v828 = vadd.s32 %v824, 3
      %v829 = vand.u32 %v828, 3
      %vm830 = vcmp.lt.s32.totalorder %v829, 2
      %vm831 = vcmp.eq.s32.totalorder %v829, 0
      %v832 = vxor.u32 %v826, 2147483648
      %v833 = vsel %vm831, %v825, %v832
      %vm834 = vcmp.eq.s32.totalorder %v829, 2
      %v835 = vxor.u32 %v825, 2147483648
      %v836 = vsel %vm834, %v835, %v826
      %v837 = vsel %vm830, %v833, %v836
      %v838 = vsel %vm827, nan, %v837
      %v839 = vld [vmem:[%s393] sm:$0xff]
      %v840 = vld [vmem:[%s393 + $0x8] sm:$0xff]
      %v841 = vld [vmem:[%s393 + $0x10] sm:$0xff]
      %v842 = vld [vmem:[%s393 + $0x18] sm:$0xff]
      %v843 = vadd.f32 %v527, %v839
      %v844 = vadd.f32 %v630, %v840
      %v845 = vadd.f32 %v734, %v841
      %v846 = vadd.f32 %v838, %v842
      %v847 = vld [vmem:[%s3] sm:$0xff]
      %v848 = vld [vmem:[%s3 + $0x8] sm:$0xff]
      %v849 = vld [vmem:[%s3 + $0x10] sm:$0xff]
      %v850 = vld [vmem:[%s3 + $0x18] sm:$0xff]
      %v851 = vld [vmem:[%s4] sm:$0xff]
      %v852 = vld [vmem:[%s4 + $0x8] sm:$0xff]
      %v853 = vld [vmem:[%s4 + $0x10] sm:$0xff]
      %v854 = vld [vmem:[%s4 + $0x18] sm:$0xff]
      %856 = vset.pattern.permute.xlu0 0
      %857 = vperm.xlu0 %856, %v851
      %v858 = vpop.permute.xlu0 %857
      %861 = vset.pattern.permute.xlu0 0
      %862 = vperm.xlu0 %861, %v852
      %v863 = vpop.permute.xlu0 %862
      %866 = vset.pattern.permute.xlu0 0
      %867 = vperm.xlu0 %866, %v853
      %v868 = vpop.permute.xlu0 %867
      %871 = vset.pattern.permute.xlu0 0
      %872 = vperm.xlu0 %871, %v854
      %v873 = vpop.permute.xlu0 %872
      %vm875 = vcmask 130048
      %v877 = vsel %vm875, %v847, 0
      %v880 = vsel %vm875, %v848, 0
      %v883 = vsel %vm875, %v849, 0
      %v886 = vsel %vm875, %v850, 0
      %888 = vmatprep.subr.mxu0 0.0
      %889 = vmatpush1.msra.mxu0 0.0
      %890 = vmatprep.subr.mxu0 0.0
      %891 = vmatpush1.msra.mxu0 0.0
      %892 = vmatprep.subr.mxu0 0.0
      %893 = vmatpush1.msra.mxu0 0.0
      %894 = vmatprep.subr.mxu0 0.0
      %895 = vmatpush1.msra.mxu0 0.0
      %896 = vmatprep.subr.mxu0 0.0
      %897 = vmatpush1.msra.mxu0 0.0
      %898 = vmatprep.subr.mxu0 0.0
      %899 = vmatpush1.msra.mxu0 0.0
      %900 = vmatprep.subr.mxu0 0.0
      %901 = vmatpush1.msra.mxu0 0.0
      %902 = vmatprep.subr.mxu0 0.0
      %903 = vmatpush1.msra.mxu0 0.0
      %904 = vmatprep.subr.mxu0 0.0
      %905 = vmatpush1.msra.mxu0 0.0
      %906 = vmatprep.subr.mxu0 0.0
      %907 = vmatpush1.msra.mxu0 0.0
      %908 = vmatprep.subr.mxu0 0.0
      %909 = vmatpush1.msra.mxu0 0.0
      %910 = vmatprep.subr.mxu0 0.0
      %911 = vmatpush1.msra.mxu0 0.0
      %912 = vmatprep.subr.mxu0 0.0
      %913 = vmatpush1.msra.mxu0 0.0
      %914 = vmatprep.subr.mxu0 0.0
      %915 = vmatpush1.msra.mxu0 0.0
      %916 = vmatprep.subr.mxu0 %v846
      %917 = vmatpush1.msra.mxu0 %v845
      %918 = vmatprep.subr.mxu0 %v844
      %919 = vmatpush1.msra.mxu0 %v843
      %920 = vmatprep.subr.mxu0 0.0
      %921 = vmatpush2.msra.mxu0 0.0
      %922 = vmatprep.subr.mxu0 0.0
      %923 = vmatpush2.msra.mxu0 0.0
      %924 = vmatprep.subr.mxu0 0.0
      %925 = vmatpush2.msra.mxu0 0.0
      %926 = vmatprep.subr.mxu0 0.0
      %927 = vmatpush2.msra.mxu0 0.0
      %928 = vmatprep.subr.mxu0 0.0
      %929 = vmatpush2.msra.mxu0 0.0
      %930 = vmatprep.subr.mxu0 0.0
      %931 = vmatpush2.msra.mxu0 0.0
      %932 = vmatprep.subr.mxu0 0.0
      %933 = vmatpush2.msra.mxu0 0.0
      %934 = vmatprep.subr.mxu0 0.0
      %935 = vmatpush2.msra.mxu0 0.0
      %936 = vmatprep.subr.mxu0 0.0
      %937 = vmatpush2.msra.mxu0 0.0
      %938 = vmatprep.subr.mxu0 0.0
      %939 = vmatpush2.msra.mxu0 0.0
      %940 = vmatprep.subr.mxu0 0.0
      %941 = vmatpush2.msra.mxu0 0.0
      %942 = vmatprep.subr.mxu0 0.0
      %943 = vmatpush2.msra.mxu0 0.0
      %944 = vmatprep.subr.mxu0 0.0
      %945 = vmatpush2.msra.mxu0 0.0
      %946 = vmatprep.subr.mxu0 0.0
      %947 = vmatpush2.msra.mxu0 0.0
      %948 = vmatprep.subr.mxu0 0.0
      %949 = vmatpush2.msra.mxu0 0.0
      %950 = vmatprep.subr.mxu0 0.0
      %951 = vmatpush2.msra.mxu0 0.0
      %952 = vmatprep.mubr.f32.mxu0 0.0
      %953 = vmatmul.mubr.f32.gmra.mxu0 %v877
      %v954 = vpop.f32.mrf.mxu0
      %v955 = vadd.f32 %v858, %v954
      %v956 = vpop.f32.mrf.mxu0
      %v957 = vadd.f32 %v858, %v956
      %958 = vmatprep.mubr.f32.mxu0 0.0
      %959 = vmatmul.mubr.f32.gmra.mxu0 %v880
      %v960 = vpop.f32.mrf.mxu0
      %v961 = vadd.f32 %v863, %v960
      %v962 = vpop.f32.mrf.mxu0
      %v963 = vadd.f32 %v863, %v962
      %964 = vmatprep.mubr.f32.mxu0 0.0
      %965 = vmatmul.mubr.f32.gmra.mxu0 %v883
      %v966 = vpop.f32.mrf.mxu0
      %v967 = vadd.f32 %v868, %v966
      %v968 = vpop.f32.mrf.mxu0
      %v969 = vadd.f32 %v868, %v968
      %970 = vmatprep.mubr.f32.mxu0 0.0
      %971 = vmatmul.mubr.f32.gmra.mxu0 %v886
      %v972 = vpop.f32.mrf.mxu0
      %v973 = vadd.f32 %v873, %v972
      %v974 = vpop.f32.mrf.mxu0
      %v975 = vadd.f32 %v873, %v974
      %976 = vdwg.mxu0
      %v977 = vmax.f32 %v955, 0.0
      %v978 = vmax.f32 %v957, 0.0
      %v979 = vmax.f32 %v961, 0.0
      %v980 = vmax.f32 %v963, 0.0
      %v981 = vmax.f32 %v967, 0.0
      %v982 = vmax.f32 %v969, 0.0
      %v983 = vmax.f32 %v973, 0.0
      %v984 = vmax.f32 %v975, 0.0
      %v985 = vld [vmem:[%s5] sm:$0xff]
      %v986 = vld [vmem:[%s5 + $0x8] sm:$0xff]
      %v987 = vld [vmem:[%s5 + $0x10] sm:$0xff]
      %v988 = vld [vmem:[%s5 + $0x18] sm:$0xff]
      %v989 = vld [vmem:[%s6] sm:$0xff]
      %v990 = vld [vmem:[%s6 + $0x8] sm:$0xff]
      %v991 = vld [vmem:[%s6 + $0x10] sm:$0xff]
      %v992 = vld [vmem:[%s6 + $0x18] sm:$0xff]
      %994 = vset.pattern.permute.xlu0 0
      %995 = vperm.xlu0 %994, %v989
      %v996 = vpop.permute.xlu0 %995
      %999 = vset.pattern.permute.xlu0 0
      %1000 = vperm.xlu0 %999, %v990
      %v1001 = vpop.permute.xlu0 %1000
      %1004 = vset.pattern.permute.xlu0 0
      %1005 = vperm.xlu0 %1004, %v991
      %v1006 = vpop.permute.xlu0 %1005
      %1009 = vset.pattern.permute.xlu0 0
      %1010 = vperm.xlu0 %1009, %v992
      %v1011 = vpop.permute.xlu0 %1010
      %vm1013 = vcmask 261120
      %v1015 = vsel %vm1013, %v985, 0
      %v1018 = vsel %vm1013, %v986, 0
      %v1021 = vsel %vm1013, %v987, 0
      %v1024 = vsel %vm1013, %v988, 0
      %1026 = vmatprep.subr.mxu0 0.0
      %1027 = vmatpush1.msra.mxu0 0.0
      %1028 = vmatprep.subr.mxu0 0.0
      %1029 = vmatpush1.msra.mxu0 0.0
      %1030 = vmatprep.subr.mxu0 0.0
      %1031 = vmatpush1.msra.mxu0 0.0
      %1032 = vmatprep.subr.mxu0 0.0
      %1033 = vmatpush1.msra.mxu0 0.0
      %1034 = vmatprep.subr.mxu0 0.0
      %1035 = vmatpush1.msra.mxu0 0.0
      %1036 = vmatprep.subr.mxu0 0.0
      %1037 = vmatpush1.msra.mxu0 0.0
      %1038 = vmatprep.subr.mxu0 0.0
      %1039 = vmatpush1.msra.mxu0 0.0
      %1040 = vmatprep.subr.mxu0 0.0
      %1041 = vmatpush1.msra.mxu0 0.0
      %1042 = vmatprep.subr.mxu0 0.0
      %1043 = vmatpush1.msra.mxu0 0.0
      %1044 = vmatprep.subr.mxu0 0.0
      %1045 = vmatpush1.msra.mxu0 0.0
      %1046 = vmatprep.subr.mxu0 0.0
      %1047 = vmatpush1.msra.mxu0 0.0
      %1048 = vmatprep.subr.mxu0 0.0
      %1049 = vmatpush1.msra.mxu0 0.0
      %1050 = vmatprep.subr.mxu0 %v984
      %1051 = vmatpush1.msra.mxu0 %v983
      %1052 = vmatprep.subr.mxu0 %v982
      %1053 = vmatpush1.msra.mxu0 %v981
      %1054 = vmatprep.subr.mxu0 %v980
      %1055 = vmatpush1.msra.mxu0 %v979
      %1056 = vmatprep.subr.mxu0 %v978
      %1057 = vmatpush1.msra.mxu0 %v977
      %1058 = vmatprep.subr.mxu0 0.0
      %1059 = vmatpush2.msra.mxu0 0.0
      %1060 = vmatprep.subr.mxu0 0.0
      %1061 = vmatpush2.msra.mxu0 0.0
      %1062 = vmatprep.subr.mxu0 0.0
      %1063 = vmatpush2.msra.mxu0 0.0
      %1064 = vmatprep.subr.mxu0 0.0
      %1065 = vmatpush2.msra.mxu0 0.0
      %1066 = vmatprep.subr.mxu0 0.0
      %1067 = vmatpush2.msra.mxu0 0.0
      %1068 = vmatprep.subr.mxu0 0.0
      %1069 = vmatpush2.msra.mxu0 0.0
      %1070 = vmatprep.subr.mxu0 0.0
      %1071 = vmatpush2.msra.mxu0 0.0
      %1072 = vmatprep.subr.mxu0 0.0
      %1073 = vmatpush2.msra.mxu0 0.0
      %1074 = vmatprep.subr.mxu0 0.0
      %1075 = vmatpush2.msra.mxu0 0.0
      %1076 = vmatprep.subr.mxu0 0.0
      %1077 = vmatpush2.msra.mxu0 0.0
      %1078 = vmatprep.subr.mxu0 0.0
      %1079 = vmatpush2.msra.mxu0 0.0
      %1080 = vmatprep.subr.mxu0 0.0
      %1081 = vmatpush2.msra.mxu0 0.0
      %1082 = vmatprep.subr.mxu0 0.0
      %1083 = vmatpush2.msra.mxu0 0.0
      %1084 = vmatprep.subr.mxu0 0.0
      %1085 = vmatpush2.msra.mxu0 0.0
      %1086 = vmatprep.subr.mxu0 0.0
      %1087 = vmatpush2.msra.mxu0 0.0
      %1088 = vmatprep.subr.mxu0 0.0
      %1089 = vmatpush2.msra.mxu0 0.0
      %1090 = vmatprep.mubr.f32.mxu0 0.0
      %1091 = vmatmul.mubr.f32.gmra.mxu0 %v1015
      %v1092 = vpop.f32.mrf.mxu0
      %v1093 = vadd.f32 %v996, %v1092
      %v1094 = vpop.f32.mrf.mxu0
      %v1095 = vadd.f32 %v996, %v1094
      %1096 = vmatprep.mubr.f32.mxu0 0.0
      %1097 = vmatmul.mubr.f32.gmra.mxu0 %v1018
      %v1098 = vpop.f32.mrf.mxu0
      %v1099 = vadd.f32 %v1001, %v1098
      %v1100 = vpop.f32.mrf.mxu0
      %v1101 = vadd.f32 %v1001, %v1100
      %1102 = vmatprep.mubr.f32.mxu0 0.0
      %1103 = vmatmul.mubr.f32.gmra.mxu0 %v1021
      %v1104 = vpop.f32.mrf.mxu0
      %v1105 = vadd.f32 %v1006, %v1104
      %v1106 = vpop.f32.mrf.mxu0
      %v1107 = vadd.f32 %v1006, %v1106
      %1108 = vmatprep.mubr.f32.mxu0 0.0
      %1109 = vmatmul.mubr.f32.gmra.mxu0 %v1024
      %v1110 = vpop.f32.mrf.mxu0
      %v1111 = vadd.f32 %v1011, %v1110
      %v1112 = vpop.f32.mrf.mxu0
      %v1113 = vadd.f32 %v1011, %v1112
      %1114 = vdwg.mxu0
      %v1115 = vmax.f32 %v1093, 0.0
      %v1116 = vmax.f32 %v1095, 0.0
      %v1117 = vmax.f32 %v1099, 0.0
      %v1118 = vmax.f32 %v1101, 0.0
      %v1119 = vmax.f32 %v1105, 0.0
      %v1120 = vmax.f32 %v1107, 0.0
      %v1121 = vmax.f32 %v1111, 0.0
      %v1122 = vmax.f32 %v1113, 0.0
      %v1123 = vld [vmem:[%s7] sm:$0x7]
      %v1124 = vld [vmem:[%s8] sm:$0x7]
      %1126 = vset.pattern.permute.xlu0 0
      %1127 = vperm.xlu0 %1126, %v1124
      %v1128 = vpop.permute.xlu0 %1127
      %v1131 = vsel %vm1013, %v1123, 0
      %1133 = vmatprep.subr.mxu0 0.0
      %1134 = vmatpush1.msra.mxu0 0.0
      %1135 = vmatprep.subr.mxu0 0.0
      %1136 = vmatpush1.msra.mxu0 0.0
      %1137 = vmatprep.subr.mxu0 0.0
      %1138 = vmatpush1.msra.mxu0 0.0
      %1139 = vmatprep.subr.mxu0 0.0
      %1140 = vmatpush1.msra.mxu0 0.0
      %1141 = vmatprep.subr.mxu0 0.0
      %1142 = vmatpush1.msra.mxu0 0.0
      %1143 = vmatprep.subr.mxu0 0.0
      %1144 = vmatpush1.msra.mxu0 0.0
      %1145 = vmatprep.subr.mxu0 0.0
      %1146 = vmatpush1.msra.mxu0 0.0
      %1147 = vmatprep.subr.mxu0 0.0
      %1148 = vmatpush1.msra.mxu0 0.0
      %1149 = vmatprep.subr.mxu0 0.0
      %1150 = vmatpush1.msra.mxu0 0.0
      %1151 = vmatprep.subr.mxu0 0.0
      %1152 = vmatpush1.msra.mxu0 0.0
      %1153 = vmatprep.subr.mxu0 0.0
      %1154 = vmatpush1.msra.mxu0 0.0
      %1155 = vmatprep.subr.mxu0 0.0
      %1156 = vmatpush1.msra.mxu0 0.0
      %1157 = vmatprep.subr.mxu0 %v1122
      %1158 = vmatpush1.msra.mxu0 %v1121
      %1159 = vmatprep.subr.mxu0 %v1120
      %1160 = vmatpush1.msra.mxu0 %v1119
      %1161 = vmatprep.subr.mxu0 %v1118
      %1162 = vmatpush1.msra.mxu0 %v1117
      %1163 = vmatprep.subr.mxu0 %v1116
      %1164 = vmatpush1.msra.mxu0 %v1115
      %1165 = vmatprep.subr.mxu0 0.0
      %1166 = vmatpush2.msra.mxu0 0.0
      %1167 = vmatprep.subr.mxu0 0.0
      %1168 = vmatpush2.msra.mxu0 0.0
      %1169 = vmatprep.subr.mxu0 0.0
      %1170 = vmatpush2.msra.mxu0 0.0
      %1171 = vmatprep.subr.mxu0 0.0
      %1172 = vmatpush2.msra.mxu0 0.0
      %1173 = vmatprep.subr.mxu0 0.0
      %1174 = vmatpush2.msra.mxu0 0.0
      %1175 = vmatprep.subr.mxu0 0.0
      %1176 = vmatpush2.msra.mxu0 0.0
      %1177 = vmatprep.subr.mxu0 0.0
      %1178 = vmatpush2.msra.mxu0 0.0
      %1179 = vmatprep.subr.mxu0 0.0
      %1180 = vmatpush2.msra.mxu0 0.0
      %1181 = vmatprep.subr.mxu0 0.0
      %1182 = vmatpush2.msra.mxu0 0.0
      %1183 = vmatprep.subr.mxu0 0.0
      %1184 = vmatpush2.msra.mxu0 0.0
      %1185 = vmatprep.subr.mxu0 0.0
      %1186 = vmatpush2.msra.mxu0 0.0
      %1187 = vmatprep.subr.mxu0 0.0
      %1188 = vmatpush2.msra.mxu0 0.0
      %1189 = vmatprep.subr.mxu0 0.0
      %1190 = vmatpush2.msra.mxu0 0.0
      %1191 = vmatprep.subr.mxu0 0.0
      %1192 = vmatpush2.msra.mxu0 0.0
      %1193 = vmatprep.subr.mxu0 0.0
      %1194 = vmatpush2.msra.mxu0 0.0
      %1195 = vmatprep.subr.mxu0 0.0
      %1196 = vmatpush2.msra.mxu0 0.0
      %1197 = vmatprep.mubr.f32.mxu0 0.0
      %1198 = vmatmul.mubr.f32.gmra.mxu0 %v1131
      %v1199 = vpop.f32.mrf.mxu0
      %v1200 = vadd.f32 %v1128, %v1199
      %v1201 = vpop.f32.mrf.mxu0
      %v1202 = vadd.f32 %v1128, %v1201
      %1203 = vdwg.mxu0
      %v1206 = vcombine.low %v1200, %v1202
      %1208 = vst [vmem:[%s403] sm:$0x77] %v1206
      %s1209 = smul.u32 2, %s25
      %p1210 = scmp.lt.s32.totalorder %s24, 1
      %s1211 = scalar_select %p1210, %s24, 1
      %p1212 = scmp.lt.s32.totalorder %s1209, 1
      %s1213 = scalar_select %p1212, %s1209, 1
      %s1214 = smul.addr %s1211, 2
      %s1215 = sadd.s32 %s1213, %s1214
      %s1216 = smul.addr %s1215, 4
      %s1217 = scalar_lea.vmem %s9, %s1216
      // Predicated region
      $region57: #{tpu_custom_call.1} parent=55 // pred_check
        %p1218 = pneg %p255
      $region58: #{tpu_custom_call.1} parent=55 // pred_check_branch
        %1220 = sbr.rel (%p1218) target = $region60
      $region59: #{tpu_custom_call.1} parent=55 // pred_region
        %s1221 = smul.u32 2, %s25
      $region60: #{tpu_custom_call.1} parent=55 // pred_fallthru
        _
    $region56: #{tpu_custom_call.1} parent=5 // pred_fallthru
      _
    %p1222 = scmp.le.s32.totalorder 2, %s15
    // Predicated region
    $region61: #{tpu_custom_call.1} parent=5 // pred_check
      %p1223 = pneg %p1222
    $region62: #{tpu_custom_call.1} parent=5 // pred_check_branch
      %1225 = sbr.rel (%p1223) target = $region64
    $region63: #{tpu_custom_call.1} parent=5 // pred_region
      %s1226 = ssub.s32 %s15, 2
      // Predicated region
      $region65: #{tpu_custom_call.1} parent=63 // pred_check
        %p1227 = pneg %p261
      $region66: #{tpu_custom_call.1} parent=63 // pred_check_branch
        %1229 = sbr.rel (%p1227) target = $region68
      $region67: #{tpu_custom_call.1} parent=63 // pred_region
        %s1230 = smul.u32 2, %s27
        %p1231 = scmp.lt.s32.totalorder %s26, 1
        %s1232 = scalar_select %p1231, %s26, 1
        %p1233 = scmp.lt.s32.totalorder %s1230, 1
        %s1234 = scalar_select %p1233, %s1230, 1
        %s1235 = smul.addr %s1232, 2
        %s1236 = sadd.s32 %s1234, %s1235
        %s1237 = smul.addr %s1236, 4
        %s1238 = scalar_lea.vmem %s9, %s1237
      $region68: #{tpu_custom_call.1} parent=63 // pred_fallthru
        _
    $region64: #{tpu_custom_call.1} parent=5 // pred_fallthru
      _
  $region6: #{tpu_custom_call.1} parent=0 // loop_footer
    %s19 = sadd.s32 1, %s15
  $region7: #{tpu_custom_call.1} parent=0 // loop_footer_branch
    %14 = sbr.rel target = $region3
  $region8: #{tpu_custom_call.1} parent=0 // loop_exit
    _

</llo_original>
